<compile_context>
chip_gen: v5e
topology: v5e:2x2
jax: 0.10.0
libtpu: 0.0.40
codegen_flags: <defaults>
</compile_context>

<pallas_src>
import jax
import jax.numpy as jnp
from jax.experimental import pallas as pl
from jax.experimental.pallas import tpu as pltpu

LANE = 128          # TPU lane width: pad feature dims for unmasked vst
SUBLANE = 8         # sublane granularity for batch-tile row counts
NEG_BIG = -1e30     # finite "-inf" bias for padded logit lanes (exp -> 0)


def _round_up(a, b):
    return (a + b - 1) // b * b


def _cdiv(a, b):
    return (a + b - 1) // b


def _tpu_config():
    """Generation-aware tile cap / VMEM budget / TensorCore count."""
    try:
        kind = jax.devices()[0].device_kind.lower()
    except Exception:
        kind = ""
    is_v7 = ("v7" in kind) or ("tpu7" in kind) or ("7x" in kind)
    if is_v7:
        # 64 MiB physical VMEM, 2 TensorCores per chip.
        return dict(tn_max=2048, vmem_limit=32 * 1024 * 1024, two_tc=True)
    # v5e / v6e: 128 MiB VMEM, 1 TensorCore.
    return dict(tn_max=4096, vmem_limit=64 * 1024 * 1024, two_tc=False)


def _pick_tile_rows(M, Hp, Cp, tn_max, vmem_limit):
    """Largest batch tile (multiple of SUBLANE) that fits the VMEM budget."""
    Mp = _round_up(M, LANE)  # x tile occupies full 128 lanes in VMEM
    # Double-buffered x / logp / z tiles + ~5 in-body f32 temporaries
    # (h, logits, shifted, exp, product) not covered by BlockSpec accounting.
    per_row = 4 * (2 * Mp + 2 * Cp + 2 * Hp + 5 * max(Hp, Cp))
    resident = 4 * 2 * (Mp * Hp + Hp * Cp + Hp + Cp)  # weights/biases, f32 worst case
    budget = int(vmem_limit * 0.6) - resident
    fit = max(SUBLANE, (budget // per_row) // SUBLANE * SUBLANE)
    return int(max(SUBLANE, min(tn_max, fit)))


def anepn_forward(x, w1_t, b1, w2_t, b2, *,
                  matmul_dtype=jnp.bfloat16,
                  out_dtype=jnp.float32,
                  fuse_passes=None,
                  tile_rows=None):
    """ANEPN forward.  x: (N, M); w1_t: (M, H); b1: (H,); w2_t: (H, C); b2: (C,).

    Weights are passed pre-transposed as (in_features, out_features).
    Returns (log_softmax(logits, axis=1), z) like the PyTorch module.
    matmul_dtype=bf16 keeps f32 accumulation but rounds the MXU operands;
    pass jnp.float32 for bit-tight numerics.
    """
    f32 = jnp.float32
    md = matmul_dtype
    N, M = x.shape
    H = w1_t.shape[1]
    C = w2_t.shape[1]

    # ---- lane-dense feature padding --------------------------------------
    Hp = _round_up(H, LANE)
    Cp = _round_up(C, LANE)

    cfg = _tpu_config()
    if fuse_passes is None:
        # Fused single call on single-TC chips; keep the split + "parallel"
        # batch axis on v7x so both TensorCores share the tiles.
        fuse_passes = not cfg["two_tc"]

    # ---- batch tiling ------------------------------------------------------
    rows = _round_up(max(N, 1), SUBLANE)
    if tile_rows is not None:
        TN = _round_up(min(int(tile_rows), rows), SUBLANE)
    else:
        TN = min(_pick_tile_rows(M, Hp, Cp, cfg["tn_max"], cfg["vmem_limit"]), rows)
        if cfg["two_tc"] and not fuse_passes and TN >= rows and rows >= 2 * SUBLANE:
            # Ensure >= 2 tiles so the parallel axis spans both v7x TensorCores.
            TN = _round_up(_cdiv(rows, 2), SUBLANE)
    num_tiles = _cdiv(N, TN)
    Npad = num_tiles * TN
    pad_rows = Npad - N

    # ---- pad + cast operands (HBM copies already in matmul dtype) ---------
    xp = jnp.pad(x.astype(f32), ((0, pad_rows), (0, 0))).astype(md)
    w1p = jnp.pad(w1_t.astype(f32), ((0, 0), (0, Hp - H))).astype(md)
    b1p = jnp.pad(b1.astype(f32), (0, Hp - H)).reshape(1, Hp)
    w2p = jnp.pad(w2_t.astype(f32), ((0, Hp - H), (0, Cp - C))).astype(md)
    b2p = jnp.pad(b2.astype(f32), (0, Cp - C),
                  constant_values=NEG_BIG).reshape(1, Cp)

    op_bytes = xp.dtype.itemsize

    if fuse_passes:
        # ------------- fused single call: grid = (phase, tile) -------------
        nt = num_tiles

        def fused_kernel(x_ref, w1_ref, b1_ref, w2_ref, b2_ref,
                         logp_ref, z_ref, ssq_ref, inv_ref):
            p = pl.program_id(0)
            i = pl.program_id(1)
            h = jnp.dot(x_ref[...], w1_ref[...],
                        preferred_element_type=f32) + b1_ref[...]      # (TN, Hp) f32

            @pl.when((p == 0) & (i == 0))
            def _init():
                ssq_ref[...] = jnp.zeros_like(ssq_ref)

            @pl.when(p == 0)
            def _phase0():
                # sum(h^2) first -> h's live range ends at the Dense2 matmul.
                ssq_ref[...] = ssq_ref[...] + jnp.sum(h * h, axis=0, keepdims=True)
                logits = jnp.dot(h.astype(md), w2_ref[...],
                                 preferred_element_type=f32) + b2_ref[...]
                m = jnp.max(logits, axis=1, keepdims=True)
                shifted = logits - m
                lse = jnp.log(jnp.sum(jnp.exp(shifted), axis=1, keepdims=True))
                logp_ref[...] = (shifted - lse).astype(logp_ref.dtype)

            @pl.when((p == 1) & (i == 0))
            def _make_inv():
                ssq = ssq_ref[...]
                if pad_rows:
                    # Zero-padded x rows contribute exactly b1^2 each.
                    ssq = jnp.maximum(
                        ssq - float(pad_rows) * (b1_ref[...] * b1_ref[...]), 0.0)
                inv_ref[...] = pl.reciprocal(jnp.sqrt(ssq) + 1e-12)

            @pl.when(p == 1)
            def _phase1():
                z_ref[...] = (h * inv_ref[...]).astype(z_ref.dtype)

        logp_pad, z_pad = pl.pallas_call(
            fused_kernel,
            grid=(2, num_tiles),
            in_specs=[
                pl.BlockSpec((TN, M), lambda p, i: (i, 0)),     # x tile
                pl.BlockSpec((M, Hp), lambda p, i: (0, 0)),     # W1 (resident)
                pl.BlockSpec((1, Hp), lambda p, i: (0, 0)),     # b1 (f32)
                pl.BlockSpec((Hp, Cp), lambda p, i: (0, 0)),    # W2 (resident)
                pl.BlockSpec((1, Cp), lambda p, i: (0, 0)),     # b2 (f32)
            ],
            out_specs=(
                # Phase 0 writes logp tile i; during phase 1 the index stays
                # pinned at the last block so the unwritten buffer is never
                # flushed with stale data.
                pl.BlockSpec((TN, Cp),
                             lambda p, i: (i * (1 - p) + (nt - 1) * p, 0)),
                # Phase 1 writes z tile i; during phase 0 it stays pinned at 0.
                pl.BlockSpec((TN, Hp), lambda p, i: (i * p, 0)),
            ),
            out_shape=(
                jax.ShapeDtypeStruct((Npad, Cp), out_dtype),
                jax.ShapeDtypeStruct((Npad, Hp), out_dtype),
            ),
            scratch_shapes=[
                pltpu.VMEM((1, Hp), f32),    # running sum(h^2)
                pltpu.VMEM((1, Hp), f32),    # 1 / (||h|| + 1e-12)
            ],
            compiler_params=pltpu.CompilerParams(
                dimension_semantics=("arbitrary", "arbitrary"),
                vmem_limit_bytes=cfg["vmem_limit"],
            ),
            cost_estimate=pl.CostEstimate(
                flops=2 * Npad * (2 * M * Hp + Hp * Cp),
                transcendentals=Npad * Cp,
                bytes_accessed=(2 * Npad * M * op_bytes
                                + 2 * (M * Hp + Hp * Cp) * op_bytes
                                + 4 * Npad * (Cp + Hp)),
            ),
        )(xp, w1p, b1p, w2p, b2p)

    else:
        # ------------- two-call split (v7x: batch axis stays parallel) -----
        compiler_params = pltpu.CompilerParams(
            dimension_semantics=("parallel",),
            vmem_limit_bytes=cfg["vmem_limit"],
        )

        def pass1_kernel(x_ref, w1_ref, b1_ref, w2_ref, b2_ref,
                         logp_ref, ssq_ref):
            h = jnp.dot(x_ref[...], w1_ref[...],
                        preferred_element_type=f32) + b1_ref[...]      # (TN, Hp) f32
            # sum(h^2) first -> h's live range ends at the Dense2 matmul.
            ssq_ref[...] = jnp.sum(h * h, axis=0, keepdims=True)[None]  # (1,1,Hp)

            logits = jnp.dot(h.astype(md), w2_ref[...],
                             preferred_element_type=f32) + b2_ref[...]  # (TN, Cp)
            m = jnp.max(logits, axis=1, keepdims=True)
            shifted = logits - m
            lse = jnp.log(jnp.sum(jnp.exp(shifted), axis=1, keepdims=True))
            logp_ref[...] = (shifted - lse).astype(logp_ref.dtype)

        logp_pad, partial_ssq = pl.pallas_call(
            pass1_kernel,
            grid=(num_tiles,),
            in_specs=[
                pl.BlockSpec((TN, M), lambda i: (i, 0)),
                pl.BlockSpec((M, Hp), lambda i: (0, 0)),
                pl.BlockSpec((1, Hp), lambda i: (0, 0)),
                pl.BlockSpec((Hp, Cp), lambda i: (0, 0)),
                pl.BlockSpec((1, Cp), lambda i: (0, 0)),
            ],
            out_specs=(
                pl.BlockSpec((TN, Cp), lambda i: (i, 0)),
                pl.BlockSpec((1, 1, Hp), lambda i: (i, 0, 0)),
            ),
            out_shape=(
                jax.ShapeDtypeStruct((Npad, Cp), out_dtype),
                jax.ShapeDtypeStruct((num_tiles, 1, Hp), f32),
            ),
            compiler_params=compiler_params,
            cost_estimate=pl.CostEstimate(
                flops=2 * Npad * (M * Hp + Hp * Cp),
                transcendentals=Npad * Cp,
                bytes_accessed=(Npad * M * op_bytes
                                + (M * Hp + Hp * Cp) * op_bytes
                                + 4 * (Hp + Cp + Npad * Cp + num_tiles * Hp)),
            ),
        )(xp, w1p, b1p, w2p, b2p)

        # Tiny cross-tile reduction + pad-row correction + inverse norm (XLA).
        sumsq = jnp.sum(partial_ssq, axis=0)                       # (1, Hp)
        if pad_rows:
            sumsq = jnp.maximum(sumsq - float(pad_rows) * (b1p * b1p), 0.0)
        inv = 1.0 / (jnp.sqrt(sumsq) + 1e-12)                      # (1, Hp) f32

        def pass2_kernel(x_ref, w1_ref, b1_ref, inv_ref, z_ref):
            # Recompute h with the identical dot (same cast inputs as pass 1).
            h = jnp.dot(x_ref[...], w1_ref[...],
                        preferred_element_type=f32) + b1_ref[...]
            z_ref[...] = (h * inv_ref[...]).astype(z_ref.dtype)

        z_pad = pl.pallas_call(
            pass2_kernel,
            grid=(num_tiles,),
            in_specs=[
                pl.BlockSpec((TN, M), lambda i: (i, 0)),
                pl.BlockSpec((M, Hp), lambda i: (0, 0)),
                pl.BlockSpec((1, Hp), lambda i: (0, 0)),
                pl.BlockSpec((1, Hp), lambda i: (0, 0)),
            ],
            out_specs=pl.BlockSpec((TN, Hp), lambda i: (i, 0)),
            out_shape=jax.ShapeDtypeStruct((Npad, Hp), out_dtype),
            compiler_params=compiler_params,
            cost_estimate=pl.CostEstimate(
                flops=2 * Npad * M * Hp + Npad * Hp,
                transcendentals=0,
                bytes_accessed=(Npad * M * op_bytes + M * Hp * op_bytes
                                + 4 * (2 * Hp + Npad * Hp)),
            ),
        )(xp, w1p, b1p, inv)

    # Slice away lane / batch padding.
    return logp_pad[:N, :C], z_pad[:N, :H]


def anepn_reference(x, w1_t, b1, w2_t, b2):
    h = x @ w1_t + b1[None, :]
    norm = jnp.linalg.norm(h, axis=0, keepdims=True) + 1e-12
    z = h / norm
    logits = h @ w2_t + b2[None, :]
    return jax.nn.log_softmax(logits, axis=1), z


if __name__ == "__main__":
    # Small shapes consistent with the module: M=32, H=64, C=16.
    M, H, C = 32, 64, 16

    key = jax.random.PRNGKey(0)
    kx1, kx2, kw1, kb1, kw2, kb2 = jax.random.split(key, 6)

    # PyTorch-style Linear init (uniform, bound = 1/sqrt(fan_in)), stored
    # pre-transposed as (in_features, out_features).
    bound1 = 1.0 / (M ** 0.5)
    w1_t = jax.random.uniform(kw1, (M, H), minval=-bound1, maxval=bound1,
                              dtype=jnp.float32)
    b1 = jax.random.uniform(kb1, (H,), minval=-bound1, maxval=bound1,
                            dtype=jnp.float32)
    bound2 = 1.0 / (H ** 0.5)
    w2_t = jax.random.uniform(kw2, (H, C), minval=-bound2, maxval=bound2,
                              dtype=jnp.float32)
    b2 = jax.random.uniform(kb2, (C,), minval=-bound2, maxval=bound2,
                            dtype=jnp.float32)

    # N=8: single tile, no pad rows.  N=20 with tile_rows=8: 3 tiles + pad-row
    # correction exercised in both the fused and split code paths.
    for N, kx, tr in ((8, kx1, None), (20, kx2, 8)):
        x = jax.random.normal(kx, (N, M), dtype=jnp.float32)
        logp_ref, z_ref = anepn_reference(x, w1_t, b1, w2_t, b2)

        # Exact (f32 MXU) path; exercise both code paths regardless of chip.
        for fuse in (True, False):
            logp, z = anepn_forward(x, w1_t, b1, w2_t, b2,
                                    matmul_dtype=jnp.float32,
                                    fuse_passes=fuse, tile_rows=tr)
            jax.block_until_ready((logp, z))
            assert logp.shape == (N, C) and z.shape == (N, H)
            assert jnp.allclose(logp, logp_ref, atol=1e-5, rtol=1e-5)
            assert jnp.allclose(z, z_ref, atol=1e-5, rtol=1e-5)

        # Fast default path: bf16 MXU operands, f32 accumulation, auto fusion.
        logp, z = anepn_forward(x, w1_t, b1, w2_t, b2)
        jax.block_until_ready((logp, z))
        assert logp.shape == (N, C) and z.shape == (N, H)
        assert jnp.allclose(logp, logp_ref, atol=5e-2, rtol=5e-2)
        assert jnp.allclose(z, z_ref, atol=5e-2, rtol=5e-2)

    print("KERNEL_OK")
</pallas_src>

<mosaic_0001>
module attributes {stable_mosaic.version = 11 : i64} {
  func.func @fused_kernel(%arg0: i32, %arg1: i32, %arg2: memref<8x32xf32, #tpu.memory_space<vmem>>, %arg3: memref<32x128xf32, #tpu.memory_space<vmem>>, %arg4: memref<1x128xf32, #tpu.memory_space<vmem>>, %arg5: memref<128x128xf32, #tpu.memory_space<vmem>>, %arg6: memref<1x128xf32, #tpu.memory_space<vmem>>, %arg7: memref<8x128xf32, #tpu.memory_space<vmem>>, %arg8: memref<8x128xf32, #tpu.memory_space<vmem>>, %arg9: memref<1x128xf32, #tpu.memory_space<vmem>>, %arg10: memref<1x128xf32, #tpu.memory_space<vmem>>) attributes {dimension_semantics = [#tpu.dimension_semantics<arbitrary>, #tpu.dimension_semantics<arbitrary>], iteration_bounds = array<i64: 2, 1>, scalar_prefetch = 0 : i64, scratch_operands = 2 : i64, tpu.core_type = #tpu.core_type<tc>, window_params = [{transform_indices = @transform_0, window_bounds = array<i64: 8, 32>}, {pipeline_mode = #tpu.pipeline_mode<synchronous>, transform_indices = @transform_1, window_bounds = array<i64: 32, 128>}, {pipeline_mode = #tpu.pipeline_mode<synchronous>, transform_indices = @transform_2, window_bounds = array<i64: 1, 128>}, {pipeline_mode = #tpu.pipeline_mode<synchronous>, transform_indices = @transform_3, window_bounds = array<i64: 128, 128>}, {pipeline_mode = #tpu.pipeline_mode<synchronous>, transform_indices = @transform_4, window_bounds = array<i64: 1, 128>}, {transform_indices = @transform_5, window_bounds = array<i64: 8, 128>}, {transform_indices = @transform_6, window_bounds = array<i64: 8, 128>}]} {
    %c0 = arith.constant 0 : index
    %c0_0 = arith.constant 0 : index
    %0 = vector.load %arg2[%c0, %c0_0] : memref<8x32xf32, #tpu.memory_space<vmem>>, vector<8x32xf32>
    %c0_1 = arith.constant 0 : index
    %c0_2 = arith.constant 0 : index
    %1 = vector.load %arg3[%c0_1, %c0_2] : memref<32x128xf32, #tpu.memory_space<vmem>>, vector<32x128xf32>
    %cst = arith.constant dense<0.000000e+00> : vector<8x128xf32>
    %2 = tpu.matmul %0, %1, %cst {dimension_numbers = #tpu.dot_dimension_numbers<[1], [0], [0], [1], [0, 0, 1, 1], [], []>} : vector<8x32xf32>, vector<32x128xf32>, vector<8x128xf32> -> vector<8x128xf32>
    %c0_3 = arith.constant 0 : index
    %c0_4 = arith.constant 0 : index
    %3 = vector.load %arg4[%c0_3, %c0_4] : memref<1x128xf32, #tpu.memory_space<vmem>>, vector<1x128xf32>
    %4 = vector.broadcast %3 : vector<1x128xf32> to vector<8x128xf32>
    %5 = arith.addf %2, %4 : vector<8x128xf32>
    %c0_i32 = arith.constant 0 : i32
    %6 = arith.cmpi eq, %arg0, %c0_i32 : i32
    %c0_i32_5 = arith.constant 0 : i32
    %7 = arith.cmpi eq, %arg1, %c0_i32_5 : i32
    %8 = arith.andi %6, %7 : i1
    %9 = arith.extui %8 : i1 to i32
    %c0_i32_6 = arith.constant 0 : i32
    %10 = arith.cmpi ne, %9, %c0_i32_6 : i32
    scf.if %10 {
      %cst_13 = arith.constant 0.000000e+00 : f32
      %22 = vector.broadcast %cst_13 : f32 to vector<1x128xf32>
      %c0_14 = arith.constant 0 : index
      %c0_15 = arith.constant 0 : index
      %23 = vector.load %arg9[%c0_14, %c0_15] : memref<1x128xf32, #tpu.memory_space<vmem>>, vector<1x128xf32>
      tpu.vector_store %arg9[%c0_14, %c0_15], %22 {strides = array<i32>} : memref<1x128xf32, #tpu.memory_space<vmem>>, vector<1x128xf32>,
    } else {
    }
    %c0_i32_7 = arith.constant 0 : i32
    %11 = arith.cmpi eq, %arg0, %c0_i32_7 : i32
    %12 = arith.extui %11 : i1 to i32
    %c0_i32_8 = arith.constant 0 : i32
    %13 = arith.cmpi ne, %12, %c0_i32_8 : i32
    scf.if %13 {
      %c0_13 = arith.constant 0 : index
      %c0_14 = arith.constant 0 : index
      %22 = vector.load %arg9[%c0_13, %c0_14] : memref<1x128xf32, #tpu.memory_space<vmem>>, vector<1x128xf32>
      %23 = arith.mulf %5, %5 : vector<8x128xf32>
      %cst_15 = arith.constant dense<0.000000e+00> : vector<128xf32>
      %24 = vector.multi_reduction <add>, %23, %cst_15 [0] : vector<8x128xf32> to vector<128xf32>
      %25 = vector.shape_cast %24 : vector<128xf32> to vector<1x128xf32>
      %26 = arith.addf %22, %25 : vector<1x128xf32>
      %c0_16 = arith.constant 0 : index
      %c0_17 = arith.constant 0 : index
      %27 = vector.load %arg9[%c0_16, %c0_17] : memref<1x128xf32, #tpu.memory_space<vmem>>, vector<1x128xf32>
      tpu.vector_store %arg9[%c0_16, %c0_17], %26 {strides = array<i32>} : memref<1x128xf32, #tpu.memory_space<vmem>>, vector<1x128xf32>,
      %c0_18 = arith.constant 0 : index
      %c0_19 = arith.constant 0 : index
      %28 = vector.load %arg5[%c0_18, %c0_19] : memref<128x128xf32, #tpu.memory_space<vmem>>, vector<128x128xf32>
      %cst_20 = arith.constant dense<0.000000e+00> : vector<8x128xf32>
      %29 = tpu.matmul %5, %28, %cst_20 {dimension_numbers = #tpu.dot_dimension_numbers<[1], [0], [0], [1], [0, 0, 1, 1], [], []>} : vector<8x128xf32>, vector<128x128xf32>, vector<8x128xf32> -> vector<8x128xf32>
      %c0_21 = arith.constant 0 : index
      %c0_22 = arith.constant 0 : index
      %30 = vector.load %arg6[%c0_21, %c0_22] : memref<1x128xf32, #tpu.memory_space<vmem>>, vector<1x128xf32>
      %31 = vector.broadcast %30 : vector<1x128xf32> to vector<8x128xf32>
      %32 = arith.addf %29, %31 : vector<8x128xf32>
      %cst_23 = arith.constant dense<0xFF800000> : vector<8xf32>
      %33 = vector.multi_reduction <maximumf>, %32, %cst_23 [1] : vector<8x128xf32> to vector<8xf32>
      %34 = vector.shape_cast %33 : vector<8xf32> to vector<8x1xf32>
      %35 = vector.broadcast %34 : vector<8x1xf32> to vector<8x128xf32>
      %36 = arith.subf %32, %35 : vector<8x128xf32>
      %37 = math.exp %36 : vector<8x128xf32>
      %cst_24 = arith.constant dense<0.000000e+00> : vector<8xf32>
      %38 = vector.multi_reduction <add>, %37, %cst_24 [1] : vector<8x128xf32> to vector<8xf32>
      %39 = vector.shape_cast %38 : vector<8xf32> to vector<8x1xf32>
      %40 = math.log %39 : vector<8x1xf32>
      %41 = vector.broadcast %40 : vector<8x1xf32> to vector<8x128xf32>
      %42 = arith.subf %36, %41 : vector<8x128xf32>
      %c0_25 = arith.constant 0 : index
      %c0_26 = arith.constant 0 : index
      %43 = vector.load %arg7[%c0_25, %c0_26] : memref<8x128xf32, #tpu.memory_space<vmem>>, vector<8x128xf32>
      tpu.vector_store %arg7[%c0_25, %c0_26], %42 {strides = array<i32>} : memref<8x128xf32, #tpu.memory_space<vmem>>, vector<8x128xf32>,
    } else {
    }
    %c1_i32 = arith.constant 1 : i32
    %14 = arith.cmpi eq, %arg0, %c1_i32 : i32
    %c0_i32_9 = arith.constant 0 : i32
    %15 = arith.cmpi eq, %arg1, %c0_i32_9 : i32
    %16 = arith.andi %14, %15 : i1
    %17 = arith.extui %16 : i1 to i32
    %c0_i32_10 = arith.constant 0 : i32
    %18 = arith.cmpi ne, %17, %c0_i32_10 : i32
    scf.if %18 {
      %c0_13 = arith.constant 0 : index
      %c0_14 = arith.constant 0 : index
      %22 = vector.load %arg9[%c0_13, %c0_14] : memref<1x128xf32, #tpu.memory_space<vmem>>, vector<1x128xf32>
      %23 = math.sqrt %22 : vector<1x128xf32>
      %cst_15 = arith.constant 9.99999996E-13 : f32
      %24 = vector.broadcast %cst_15 : f32 to vector<1x128xf32>
      %25 = arith.addf %23, %24 : vector<1x128xf32>
      %26 = tpu.reciprocal %25 : vector<1x128xf32> -> vector<1x128xf32>
      %c0_16 = arith.constant 0 : index
      %c0_17 = arith.constant 0 : index
      %27 = vector.load %arg10[%c0_16, %c0_17] : memref<1x128xf32, #tpu.memory_space<vmem>>, vector<1x128xf32>
      tpu.vector_store %arg10[%c0_16, %c0_17], %26 {strides = array<i32>} : memref<1x128xf32, #tpu.memory_space<vmem>>, vector<1x128xf32>,
    } else {
    }
    %c1_i32_11 = arith.constant 1 : i32
    %19 = arith.cmpi eq, %arg0, %c1_i32_11 : i32
    %20 = arith.extui %19 : i1 to i32
    %c0_i32_12 = arith.constant 0 : i32
    %21 = arith.cmpi ne, %20, %c0_i32_12 : i32
    scf.if %21 {
      %c0_13 = arith.constant 0 : index
      %c0_14 = arith.constant 0 : index
      %22 = vector.load %arg10[%c0_13, %c0_14] : memref<1x128xf32, #tpu.memory_space<vmem>>, vector<1x128xf32>
      %23 = vector.broadcast %22 : vector<1x128xf32> to vector<8x128xf32>
      %24 = arith.mulf %5, %23 : vector<8x128xf32>
      %c0_15 = arith.constant 0 : index
      %c0_16 = arith.constant 0 : index
      %25 = vector.load %arg8[%c0_15, %c0_16] : memref<8x128xf32, #tpu.memory_space<vmem>>, vector<8x128xf32>
      tpu.vector_store %arg8[%c0_15, %c0_16], %24 {strides = array<i32>} : memref<8x128xf32, #tpu.memory_space<vmem>>, vector<8x128xf32>,
    } else {
    }
    return
  }
  func.func @transform_0(%arg0: i32, %arg1: i32) -> (i32, i32) {
    %c0_i32 = arith.constant 0 : i32
    %c0_i32_0 = arith.constant 0 : i32
    return %arg1, %c0_i32 : i32, i32
  }
  func.func @transform_1(%arg0: i32, %arg1: i32) -> (i32, i32) {
    %c0_i32 = arith.constant 0 : i32
    %c0_i32_0 = arith.constant 0 : i32
    %c0_i32_1 = arith.constant 0 : i32
    return %c0_i32, %c0_i32_0 : i32, i32
  }
  func.func @transform_2(%arg0: i32, %arg1: i32) -> (i32, i32) {
    %c0_i32 = arith.constant 0 : i32
    %c0_i32_0 = arith.constant 0 : i32
    %c0_i32_1 = arith.constant 0 : i32
    return %c0_i32, %c0_i32_0 : i32, i32
  }
  func.func @transform_3(%arg0: i32, %arg1: i32) -> (i32, i32) {
    %c0_i32 = arith.constant 0 : i32
    %c0_i32_0 = arith.constant 0 : i32
    %c0_i32_1 = arith.constant 0 : i32
    return %c0_i32, %c0_i32_0 : i32, i32
  }
  func.func @transform_4(%arg0: i32, %arg1: i32) -> (i32, i32) {
    %c0_i32 = arith.constant 0 : i32
    %c0_i32_0 = arith.constant 0 : i32
    %c0_i32_1 = arith.constant 0 : i32
    return %c0_i32, %c0_i32_0 : i32, i32
  }
  func.func @transform_5(%arg0: i32, %arg1: i32) -> (i32, i32) {
    %c1_i32 = arith.constant 1 : i32
    %0 = arith.subi %c1_i32, %arg0 : i32
    %1 = arith.muli %arg1, %0 : i32
    %c0_i32 = arith.constant 0 : i32
    %2 = arith.muli %c0_i32, %arg0 : i32
    %3 = arith.addi %1, %2 : i32
    %c0_i32_0 = arith.constant 0 : i32
    %c0_i32_1 = arith.constant 0 : i32
    return %3, %c0_i32_0 : i32, i32
  }
  func.func @transform_6(%arg0: i32, %arg1: i32) -> (i32, i32) {
    %0 = arith.muli %arg1, %arg0 : i32
    %c0_i32 = arith.constant 0 : i32
    %c0_i32_0 = arith.constant 0 : i32
    return %0, %c0_i32 : i32, i32
  }
}

</mosaic_0001>

<llo_original>
// kernel: tpu_custom_call.1
$region0: #{tpu_custom_call.1}
  #allocation0 [shape = 'u32[]', space=smem, size = 0x4, offset = 0x4, fixed_abs, tag = 'smem constant byte address 0x4 - core index']
  #allocation1 [shape = 'u32[72,128]{1,0:T(1,128)}', space=vmem, size = 0x9000, scoped, tag = 'internal scratch']
  #allocation2 [shape = 'f32[1,128]{1,0:T(1,128)}', space=vmem, size = 0x200, scoped, tag = 'scratch operand']
  #allocation3 [shape = 'f32[1,128]{1,0:T(1,128)}', space=vmem, size = 0x200, scoped, tag = 'scratch operand']
  %s0 = inlined_call_operand.hbm [shape: f32[8,32], index: 0, kind: input, shape index: {}]
  %s1 = inlined_call_operand.hbm [shape: f32[32,128], index: 1, kind: input, shape index: {}]
  %s2 = inlined_call_operand.vmem [shape: f32[1,128], index: 2, kind: input, shape index: {}]
  %s3 = inlined_call_operand.hbm [shape: f32[128,128], index: 3, kind: input, shape index: {}]
  %s4 = inlined_call_operand.vmem [shape: f32[1,128], index: 4, kind: input, shape index: {}]
  %s5 = inlined_call_operand.hbm [shape: f32[8,128], index: 5, kind: output, shape index: {0}]
  %s6 = inlined_call_operand.hbm [shape: f32[8,128], index: 6, kind: output, shape index: {1}]
  %7 = xla_tuple %s5, %s6
  %s8 = sld [smem:[#allocation0]]
  $region89: #{tpu_custom_call.1} parent=0
    _
  %s10 = ssub.s32 1, %s8
  %s11 = scalar_select 0, %s10, %s8
  $region1: #{tpu_custom_call.1} parent=0
    #allocation4 [shape = 'u8[4096]{0}', space=vmem, size = 0x1000, scoped, tag = 'input window, operand 0, single buffered']
    #allocation5 [shape = 's32[2]{0}', space=sflag, size = 0x8, scoped, tag = 'scoped memory for tpu_custom_call.1']
    #allocation6 [shape = 's32[2]{0}', space=sflag, size = 0x8, scoped, tag = 'scoped memory for tpu_custom_call.1']
    #allocation7 [shape = 'u8[16384]{0}', space=vmem, size = 0x4000, scoped, tag = 'input window, operand 1, single buffered']
    #allocation8 [shape = 's32[1]{0}', space=sflag, size = 0x4, scoped, tag = 'scoped memory for tpu_custom_call.1']
    #allocation9 [shape = 'u8[65536]{0}', space=vmem, size = 0x10000, scoped, tag = 'input window, operand 3, single buffered']
    #allocation10 [shape = 'u8[8192]{0}', space=vmem, size = 0x2000, scoped, tag = 'output window, operand 0']
    #allocation11 [shape = 'u8[8192]{0}', space=vmem, size = 0x2000, scoped, tag = 'output window, operand 1']
    #allocation12 [shape = 's32[2]{0}', space=sflag, size = 0x8, scoped, tag = 'scoped memory for tpu_custom_call.1']
    %12 = vsyncpa [#allocation5], 0
    %13 = vsyncpa [#allocation8], 0
    %14 = vsyncpa [#allocation6], 0
    %s15 = scalar_lea.sflag [#allocation6], 1
    %16 = vsyncpa %s15, 0
    %17 = vsyncpa [#allocation12], 0
    %s18 = scalar_lea.sflag [#allocation12], 1
    %19 = vsyncpa %s18, 0
    loop: start=0, step=1, limit=4
    $region2: #{tpu_custom_call.1} parent=1 // loop_pre_header
      _
    $region3: #{tpu_custom_call.1} parent=1 // loop_header
      %s21 = sphi 0, %s25
      %p22 = scmp.ge.s32.totalorder %s21, 4
      %s28 = sphi 0, %s40
      %s29 = sphi 0, %s36
      %s30 = sphi 0, %s28
      %s31 = sphi 0, %s29
      %s32 = sphi 0, %s30
      %s33 = sphi 0, %s31
      %s43 = sphi 0, %s45
      %s46 = sphi 0, %s43
      %s47 = sphi 0, %s46
      %s63 = sphi 0, %s47
      %s67 = sphi 0, %s67
      %s69 = sphi 0, %s67
      %s70 = sphi 0, %s69
      %s84 = sphi 0, %s70
      %s88 = sphi 0, %s88
      %s90 = sphi 0, %s88
      %s91 = sphi 0, %s90
      %s105 = sphi 0, %s91
      %s109 = sphi 0, %s109
      %s111 = sphi 0, %s109
      %s112 = sphi 0, %s111
      %s126 = sphi 0, %s112
      %s130 = sphi 0, %s130
      %s132 = sphi 0, %s130
      %s133 = sphi 0, %s132
      %s147 = sphi 0, %s133
      %s157 = sphi 0, %s159
      %s160 = sphi 0, %s157
      %s161 = sphi 0, %s160
      %s177 = sphi 0, %s161
      %s185 = sphi 0, %s187
      %s188 = sphi 0, %s185
      %s189 = sphi 0, %s188
      %s205 = sphi 0, %s189
    $region4: #{tpu_custom_call.1} parent=1 // loop_header_branch
      %24 = sbr.rel (%p22) target = $region8
    $region5: #{tpu_custom_call.1} parent=1 // loop_body
      %s26 = ssub.s32 %s21, 1
      %s27 = ssub.s32 %s21, 2
      %s34 = sadd.s32 1, %s29
      %p35 = scmp.ge.s32.totalorder %s34, 1
      %s36 = scalar_select %p35, 0, %s34
      %s37 = sadd.s32 1, %s28
      %s38 = scalar_select %p35, %s37, %s28
      %p39 = scmp.ge.s32.totalorder %s38, 2
      %s40 = scalar_select %p39, 0, %s38
      %s41 = ssub.s32 %s29, %s36
      %p42 = scmp.eq.s32.totalorder %s41, 0
      %s44 = sadd.s32 %s43, 1
      %s45 = scalar_select %p42, %s43, %s44
      %p48 = pneg %p42
      %p49 = scmp.eq.s32.totalorder %s21, 1
      %p50 = por %p48, %p49
      %p51 = scmp.ne.s32.totalorder %s43, %s46
      %p52 = scmp.eq.s32.totalorder %s21, 0
      %p53 = por %p51, %p52
      %p54 = scmp.ne.s32.totalorder %s43, %s46
      %p55 = scmp.eq.s32.totalorder %s26, 1
      %p56 = por %p54, %p55
      %p57 = scmp.ne.s32.totalorder %s46, %s47
      %p58 = scmp.eq.s32.totalorder %s26, 0
      %p59 = por %p57, %p58
      %p60 = scmp.ne.s32.totalorder %s46, %s47
      %p61 = scmp.eq.s32.totalorder %s27, 1
      %p62 = por %p60, %p61
      %p64 = scmp.ne.s32.totalorder %s47, %s63
      %p65 = scmp.eq.s32.totalorder %s27, 0
      %p66 = por %p64, %p65
      %s68 = sadd.s32 %s67, 1
      %p71 = scmp.eq.s32.totalorder %s21, 1
      %p72 = scmp.ne.s32.totalorder %s67, %s69
      %p73 = scmp.eq.s32.totalorder %s21, 0
      %p74 = por %p72, %p73
      %p75 = scmp.ne.s32.totalorder %s67, %s69
      %p76 = scmp.eq.s32.totalorder %s26, 1
      %p77 = por %p75, %p76
      %p78 = scmp.ne.s32.totalorder %s69, %s70
      %p79 = scmp.eq.s32.totalorder %s26, 0
      %p80 = por %p78, %p79
      %p81 = scmp.ne.s32.totalorder %s69, %s70
      %p82 = scmp.eq.s32.totalorder %s27, 1
      %p83 = por %p81, %p82
      %p85 = scmp.ne.s32.totalorder %s70, %s84
      %p86 = scmp.eq.s32.totalorder %s27, 0
      %p87 = por %p85, %p86
      %s89 = sadd.s32 %s88, 1
      %p92 = scmp.eq.s32.totalorder %s21, 1
      %p93 = scmp.ne.s32.totalorder %s88, %s90
      %p94 = scmp.eq.s32.totalorder %s21, 0
      %p95 = por %p93, %p94
      %p96 = scmp.ne.s32.totalorder %s88, %s90
      %p97 = scmp.eq.s32.totalorder %s26, 1
      %p98 = por %p96, %p97
      %p99 = scmp.ne.s32.totalorder %s90, %s91
      %p100 = scmp.eq.s32.totalorder %s26, 0
      %p101 = por %p99, %p100
      %p102 = scmp.ne.s32.totalorder %s90, %s91
      %p103 = scmp.eq.s32.totalorder %s27, 1
      %p104 = por %p102, %p103
      %p106 = scmp.ne.s32.totalorder %s91, %s105
      %p107 = scmp.eq.s32.totalorder %s27, 0
      %p108 = por %p106, %p107
      %s110 = sadd.s32 %s109, 1
      %p113 = scmp.eq.s32.totalorder %s21, 1
      %p114 = scmp.ne.s32.totalorder %s109, %s111
      %p115 = scmp.eq.s32.totalorder %s21, 0
      %p116 = por %p114, %p115
      %p117 = scmp.ne.s32.totalorder %s109, %s111
      %p118 = scmp.eq.s32.totalorder %s26, 1
      %p119 = por %p117, %p118
      %p120 = scmp.ne.s32.totalorder %s111, %s112
      %p121 = scmp.eq.s32.totalorder %s26, 0
      %p122 = por %p120, %p121
      %p123 = scmp.ne.s32.totalorder %s111, %s112
      %p124 = scmp.eq.s32.totalorder %s27, 1
      %p125 = por %p123, %p124
      %p127 = scmp.ne.s32.totalorder %s112, %s126
      %p128 = scmp.eq.s32.totalorder %s27, 0
      %p129 = por %p127, %p128
      %s131 = sadd.s32 %s130, 1
      %p134 = scmp.eq.s32.totalorder %s21, 1
      %p135 = scmp.ne.s32.totalorder %s130, %s132
      %p136 = scmp.eq.s32.totalorder %s21, 0
      %p137 = por %p135, %p136
      %p138 = scmp.ne.s32.totalorder %s130, %s132
      %p139 = scmp.eq.s32.totalorder %s26, 1
      %p140 = por %p138, %p139
      %p141 = scmp.ne.s32.totalorder %s132, %s133
      %p142 = scmp.eq.s32.totalorder %s26, 0
      %p143 = por %p141, %p142
      %p144 = scmp.ne.s32.totalorder %s132, %s133
      %p145 = scmp.eq.s32.totalorder %s27, 1
      %p146 = por %p144, %p145
      %p148 = scmp.ne.s32.totalorder %s133, %s147
      %p149 = scmp.eq.s32.totalorder %s27, 0
      %p150 = por %p148, %p149
      %s151 = ssub.s32 1, %s28
      %s152 = smul.u32 %s29, %s151
      %s153 = ssub.s32 1, %s40
      %s154 = smul.u32 %s36, %s153
      %s155 = ssub.s32 %s152, %s154
      %p156 = scmp.eq.s32.totalorder %s155, 0
      %s158 = sadd.s32 %s157, 1
      %s159 = scalar_select %p156, %s157, %s158
      %p162 = pneg %p156
      %p163 = scmp.eq.s32.totalorder %s21, 1
      %p164 = por %p162, %p163
      %p165 = scmp.ne.s32.totalorder %s157, %s160
      %p166 = scmp.eq.s32.totalorder %s21, 0
      %p167 = por %p165, %p166
      %p168 = scmp.ne.s32.totalorder %s157, %s160
      %p169 = scmp.eq.s32.totalorder %s26, 1
      %p170 = por %p168, %p169
      %p171 = scmp.ne.s32.totalorder %s160, %s161
      %p172 = scmp.eq.s32.totalorder %s26, 0
      %p173 = por %p171, %p172
      %p174 = scmp.ne.s32.totalorder %s160, %s161
      %p175 = scmp.eq.s32.totalorder %s27, 1
      %p176 = por %p174, %p175
      %p178 = scmp.ne.s32.totalorder %s161, %s177
      %p179 = scmp.eq.s32.totalorder %s27, 0
      %p180 = por %p178, %p179
      %s181 = smul.u32 %s29, %s28
      %s182 = smul.u32 %s36, %s40
      %s183 = ssub.s32 %s181, %s182
      %p184 = scmp.eq.s32.totalorder %s183, 0
      %s186 = sadd.s32 %s185, 1
      %s187 = scalar_select %p184, %s185, %s186
      %p190 = pneg %p184
      %p191 = scmp.eq.s32.totalorder %s21, 1
      %p192 = por %p190, %p191
      %p193 = scmp.ne.s32.totalorder %s185, %s188
      %p194 = scmp.eq.s32.totalorder %s21, 0
      %p195 = por %p193, %p194
      %p196 = scmp.ne.s32.totalorder %s185, %s188
      %p197 = scmp.eq.s32.totalorder %s26, 1
      %p198 = por %p196, %p197
      %p199 = scmp.ne.s32.totalorder %s188, %s189
      %p200 = scmp.eq.s32.totalorder %s26, 0
      %p201 = por %p199, %p200
      %p202 = scmp.ne.s32.totalorder %s188, %s189
      %p203 = scmp.eq.s32.totalorder %s27, 1
      %p204 = por %p202, %p203
      %p206 = scmp.ne.s32.totalorder %s189, %s205
      %p207 = scmp.eq.s32.totalorder %s27, 0
      %p208 = por %p206, %p207
      %p209 = scmp.le.s32.totalorder 1, %s21
      %p210 = scmp.lt.s32.totalorder %s21, 3
      %p211 = pnand %p209, %p210
      %p212 = pneg %p211
      // Predicated region
      $region9: #{tpu_custom_call.1} parent=5 // pred_check
        _
      $region10: #{tpu_custom_call.1} parent=5 // pred_check_branch
        %214 = sbr.rel (%p211) target = $region12
      $region11: #{tpu_custom_call.1} parent=5 // pred_region
        %s215 = ssub.s32 %s21, 1
        // Predicated region
        $region13: #{tpu_custom_call.1} parent=11 // pred_check
          %p216 = pneg %p59
        $region14: #{tpu_custom_call.1} parent=11 // pred_check_branch
          %218 = sbr.rel (%p216) target = $region16
        $region15: #{tpu_custom_call.1} parent=11 // pred_region
          %220 = vsyncadd [#allocation5], 0
          %s221 = smul.addr %s31, 8
          %s222 = scalar_lea.hbm %s0, %s221
          %s224 = sshll.u32 %s222, 4
          %s225 = int_to_ptr.hbm [resolvable:$true] %s224
          %s226 = sshll.u32 [#allocation4], 4
          %s227 = int_to_ptr.vmem [resolvable:$true] %s226
          %229 = dma.hbm_to_vmem [thread:$0]  %s225, 128, %s227, [#allocation5]
        $region16: #{tpu_custom_call.1} parent=11 // pred_fallthru
          _
        // Predicated region
        $region17: #{tpu_custom_call.1} parent=11 // pred_check
          %p230 = pneg %p80
        $region18: #{tpu_custom_call.1} parent=11 // pred_check_branch
          %232 = sbr.rel (%p230) target = $region20
        $region19: #{tpu_custom_call.1} parent=11 // pred_region
          %234 = vsyncadd [#allocation8], 0
          %s235 = sshll.u32 %s1, 4
          %s236 = int_to_ptr.hbm [resolvable:$true] %s235
          %s237 = sshll.u32 [#allocation7], 4
          %s238 = int_to_ptr.vmem [resolvable:$true] %s237
          %243 = dma.hbm_to_vmem [thread:$0]  %s236, 512, %s238, [#allocation8], 128, 128, 8
        $region20: #{tpu_custom_call.1} parent=11 // pred_fallthru
          _
        // Predicated region
        $region21: #{tpu_custom_call.1} parent=11 // pred_check
          %p244 = pneg %p101
        $region22: #{tpu_custom_call.1} parent=11 // pred_check_branch
          %246 = sbr.rel (%p244) target = $region24
        $region23: #{tpu_custom_call.1} parent=11 // pred_region
          _
        $region24: #{tpu_custom_call.1} parent=11 // pred_fallthru
          _
        // Predicated region
        $region25: #{tpu_custom_call.1} parent=11 // pred_check
          %p247 = pneg %p122
        $region26: #{tpu_custom_call.1} parent=11 // pred_check_branch
          %249 = sbr.rel (%p247) target = $region28
        $region27: #{tpu_custom_call.1} parent=11 // pred_region
          %251 = vsyncadd [#allocation8], 0
          %s252 = sshll.u32 %s3, 4
          %s253 = int_to_ptr.hbm [resolvable:$true] %s252
          %s254 = sshll.u32 [#allocation9], 4
          %s255 = int_to_ptr.vmem [resolvable:$true] %s254
          %260 = dma.hbm_to_vmem [thread:$0]  %s253, 2048, %s255, [#allocation8], 128, 128, 8
        $region28: #{tpu_custom_call.1} parent=11 // pred_fallthru
          _
        // Predicated region
        $region29: #{tpu_custom_call.1} parent=11 // pred_check
          %p261 = pneg %p143
        $region30: #{tpu_custom_call.1} parent=11 // pred_check_branch
          %263 = sbr.rel (%p261) target = $region32
        $region31: #{tpu_custom_call.1} parent=11 // pred_region
          _
        $region32: #{tpu_custom_call.1} parent=11 // pred_fallthru
          _
      $region12: #{tpu_custom_call.1} parent=5 // pred_fallthru
        _
      %p264 = scmp.lt.s32.totalorder %s21, 2
      // Predicated region
      $region33: #{tpu_custom_call.1} parent=5 // pred_check
        %p265 = pneg %p264
      $region34: #{tpu_custom_call.1} parent=5 // pred_check_branch
        %267 = sbr.rel (%p265) target = $region36
      $region35: #{tpu_custom_call.1} parent=5 // pred_region
        _
      $region36: #{tpu_custom_call.1} parent=5 // pred_fallthru
        _
      %p268 = scmp.le.s32.totalorder 1, %s21
      %p269 = scmp.lt.s32.totalorder %s21, 3
      %p270 = pnand %p268, %p269
      %p271 = pneg %p270
      // Predicated region
      $region37: #{tpu_custom_call.1} parent=5 // pred_check
        _
      $region38: #{tpu_custom_call.1} parent=5 // pred_check_branch
        %273 = sbr.rel (%p270) target = $region40
      $region39: #{tpu_custom_call.1} parent=5 // pred_region
        %s274 = ssub.s32 %s21, 1
        // Predicated region
        $region41: #{tpu_custom_call.1} parent=39 // pred_check
          %p275 = pneg %p59
        $region42: #{tpu_custom_call.1} parent=39 // pred_check_branch
          %277 = sbr.rel (%p275) target = $region44
        $region43: #{tpu_custom_call.1} parent=39 // pred_region
          %279 = dma.done [#allocation5], 128
        $region44: #{tpu_custom_call.1} parent=39 // pred_fallthru
          _
        // Predicated region
        $region45: #{tpu_custom_call.1} parent=39 // pred_check
          %p280 = pneg %p80
        $region46: #{tpu_custom_call.1} parent=39 // pred_check_branch
          %282 = sbr.rel (%p280) target = $region48
        $region47: #{tpu_custom_call.1} parent=39 // pred_region
          %284 = dma.done [#allocation8], 512
        $region48: #{tpu_custom_call.1} parent=39 // pred_fallthru
          _
        // Predicated region
        $region49: #{tpu_custom_call.1} parent=39 // pred_check
          %p285 = pneg %p122
        $region50: #{tpu_custom_call.1} parent=39 // pred_check_branch
          %287 = sbr.rel (%p285) target = $region52
        $region51: #{tpu_custom_call.1} parent=39 // pred_region
          %289 = dma.done [#allocation8], 2048
        $region52: #{tpu_custom_call.1} parent=39 // pred_fallthru
          _
        %p290 = pneg %p59
        %p291 = pneg %p56
        %p292 = pneg %p80
        %p293 = pneg %p77
        %p294 = pneg %p101
        %p295 = pneg %p98
        %p296 = pneg %p122
        %p297 = pneg %p119
        %p298 = pneg %p143
        %p299 = pneg %p140
        %p300 = pneg %p173
        %p301 = pneg %p170
        %s302 = sand.u32 %s160, 1
        %s303 = scalar_lea.sflag [#allocation6], %s302
        %s304 = sand.u32 %s160, 1
        %s305 = smul.addr %s304, 8
        %s306 = scalar_lea.vmem [#allocation10], %s305
        %p307 = pneg %p201
        %p308 = pneg %p198
        %s309 = sand.u32 %s188, 1
        %s310 = scalar_lea.sflag [#allocation12], %s309
        %s311 = sand.u32 %s188, 1
        %s312 = smul.addr %s311, 8
        %s313 = scalar_lea.vmem [#allocation11], %s312
        %s314 = ssub.s32 1, %s30
        %s315 = smul.u32 %s31, %s314
        %s316 = smul.u32 %s31, %s30
        %v317 = vld [vmem:[#allocation4] sm:$0xff]
        %v318 = vld [vmem:[#allocation7] sm:$0xff]
        %v319 = vld [vmem:[#allocation7 + $0x8] sm:$0xff]
        %v320 = vld [vmem:[#allocation7 + $0x10] sm:$0xff]
        %v321 = vld [vmem:[#allocation7 + $0x18] sm:$0xff]
        %v322 = vld [vmem:[%s2] sm:$0x1]
        %v324 = vperm.slane %v322, 0
        %vm326 = vcmask 261120
        %v328 = vsel %vm326, %v317, 0
        %330 = vmatpush.msra.mxu0 0.0
        %331 = vmatpush.msra.mxu0 0.0
        %332 = vmatpush.msra.mxu0 0.0
        %333 = vmatpush.msra.mxu0 0.0
        %334 = vmatpush.msra.mxu0 0.0
        %335 = vmatpush.msra.mxu0 0.0
        %336 = vmatpush.msra.mxu0 0.0
        %337 = vmatpush.msra.mxu0 0.0
        %338 = vmatpush.msra.mxu0 0.0
        %339 = vmatpush.msra.mxu0 0.0
        %340 = vmatpush.msra.mxu0 0.0
        %341 = vmatpush.msra.mxu0 0.0
        %342 = vmatpush.msra.mxu0 %v321
        %343 = vmatpush.msra.mxu0 %v320
        %344 = vmatpush.msra.mxu0 %v319
        %345 = vmatpush.msra.mxu0 %v318
        %346 = vmatmul.f32.gmra.mxu0 %v328
        %v347 = vpop.f32.mrf.mxu0
        %v348 = vadd.f32 %v324, %v347
        %349 = vdwg.mxu0
        %p350 = scmp.eq.s32.totalorder %s30, 0
        %p351 = scmp.eq.s32.totalorder %s31, 0
        %p352 = pnand %p350, %p351
        %p353 = pneg %p352
        // Predicated region
        $region53: #{tpu_custom_call.1} parent=39 // pred_check
          _
        $region54: #{tpu_custom_call.1} parent=39 // pred_check_branch
          %355 = sbr.rel (%p352) target = $region56
        $region55: #{tpu_custom_call.1} parent=39 // pred_region
          %356 = vst [vmem:[#allocation2] sm:$0x1] 0.0
        $region56: #{tpu_custom_call.1} parent=39 // pred_fallthru
          _
        // Predicated region
        $region57: #{tpu_custom_call.1} parent=39 // pred_check
          %p357 = pneg %p350
        $region58: #{tpu_custom_call.1} parent=39 // pred_check_branch
          %359 = sbr.rel (%p357) target = $region60
        $region59: #{tpu_custom_call.1} parent=39 // pred_region
          %v360 = vld [vmem:[#allocation2] sm:$0x1]
          %v361 = vmul.f32 %v348, %v348
          %v362 = vrot.slane %v361, 4
          %v363 = vadd.f32 %v361, %v362
          %v364 = vrot.slane %v363, 2
          %v365 = vadd.f32 %v363, %v364
          %v366 = vrot.slane %v365, 1
          %v367 = vadd.f32 %v365, %v366
          %v368 = vadd.f32 %v360, %v367
          %369 = vst [vmem:[#allocation2] sm:$0x1] %v368
          %v370 = vld [vmem:[#allocation9] sm:$0xff]
          %v371 = vld [vmem:[#allocation9 + $0x8] sm:$0xff]
          %v372 = vld [vmem:[#allocation9 + $0x10] sm:$0xff]
          %v373 = vld [vmem:[#allocation9 + $0x18] sm:$0xff]
          %v374 = vld [vmem:[#allocation9 + $0x20] sm:$0xff]
          %v375 = vld [vmem:[#allocation9 + $0x28] sm:$0xff]
          %v376 = vld [vmem:[#allocation9 + $0x30] sm:$0xff]
          %v377 = vld [vmem:[#allocation9 + $0x38] sm:$0xff]
          %v378 = vld [vmem:[#allocation9 + $0x40] sm:$0xff]
          %v379 = vld [vmem:[#allocation9 + $0x48] sm:$0xff]
          %v380 = vld [vmem:[#allocation9 + $0x50] sm:$0xff]
          %v381 = vld [vmem:[#allocation9 + $0x58] sm:$0xff]
          %v382 = vld [vmem:[#allocation9 + $0x60] sm:$0xff]
          %v383 = vld [vmem:[#allocation9 + $0x68] sm:$0xff]
          %v384 = vld [vmem:[#allocation9 + $0x70] sm:$0xff]
          %v385 = vld [vmem:[#allocation9 + $0x78] sm:$0xff]
          %v386 = vld [vmem:[%s4] sm:$0x1]
          %v388 = vperm.slane %v386, 0
          %390 = vmatpush.msra.mxu0 %v385
          %391 = vmatpush.msra.mxu0 %v384
          %392 = vmatpush.msra.mxu0 %v383
          %393 = vmatpush.msra.mxu0 %v382
          %394 = vmatpush.msra.mxu0 %v381
          %395 = vmatpush.msra.mxu0 %v380
          %396 = vmatpush.msra.mxu0 %v379
          %397 = vmatpush.msra.mxu0 %v378
          %398 = vmatpush.msra.mxu0 %v377
          %399 = vmatpush.msra.mxu0 %v376
          %400 = vmatpush.msra.mxu0 %v375
          %401 = vmatpush.msra.mxu0 %v374
          %402 = vmatpush.msra.mxu0 %v373
          %403 = vmatpush.msra.mxu0 %v372
          %404 = vmatpush.msra.mxu0 %v371
          %405 = vmatpush.msra.mxu0 %v370
          %406 = vmatmul.f32.gmra.mxu0 %v348
          %v407 = vpop.f32.mrf.mxu0
          %v408 = vadd.f32 %v388, %v407
          %409 = vdwg.mxu0
          %410 = vmax.xlane.f32.xlu0 %v408
          %v411 = vpop.xlane.xlu0 %410
          %v412 = vsub.f32 %v408, %v411
          %v413 = vmul.f32 %v412, 1.442695
          %v414 = vpow.pop %v413
          %415 = vadd.xlane.f32.xlu0 %v414
          %v416 = vpop.xlane.xlu0 %415
          %v417 = vlog2.pop %v416
          %v418 = vmul.f32 %v417, 0.6931472
          %v419 = vsub.f32 %v412, %v418
          %420 = vst [vmem:[%s306] sm:$0xff] %v419
        $region60: #{tpu_custom_call.1} parent=39 // pred_fallthru
          _
        %p421 = scmp.eq.s32.totalorder %s30, 1
        %p422 = pnand %p421, %p351
        %p423 = pneg %p422
        // Predicated region
        $region61: #{tpu_custom_call.1} parent=39 // pred_check
          _
        $region62: #{tpu_custom_call.1} parent=39 // pred_check_branch
          %425 = sbr.rel (%p422) target = $region64
        $region63: #{tpu_custom_call.1} parent=39 // pred_region
          %v426 = vld [vmem:[#allocation2] sm:$0x1]
          %v427 = vrsqrt.pop %v426
          %v428 = vmul.f32 %v427, %v426
          %v429 = vmul.f32 %v428, %v427
          %v430 = vmul.f32 0.5, %v429
          %v431 = vsub.f32 1.5, %v430
          %v432 = vmul.f32 %v427, %v431
          %v433 = vmul.f32 %v426, %v432
          %vm434 = vcmp.eq.f32.partialorder %v426, inf
          %v435 = vsel %vm434, %v426, %v433
          %vm436 = vcmp.eq.f32.partialorder %v426, 0.0
          %v437 = vand.u32 %v426, 2147483648
          %v438 = vsel %vm436, %v437, %v435
          %v439 = vadd.f32 %v438, 1e-12
          %v440 = vrcp.pop %v439
          %v441 = vmul.f32 %v439, %v440
          %v442 = vsub.f32 1.0, %v441
          %v443 = vmul.f32 %v440, %v442
          %v444 = vadd.f32 %v440, %v443
          %vm445 = vweird.f32 %v439
          %vm446 = vweird.f32 %v440
          %vm447 = vmor %vm445, %vm446
          %v448 = vsel %vm447, %v440, %v444
          %v449 = vand.u32 2147483647, %v439
          %vm450 = vcmp.eq.f32.partialorder %v449, 8.507059e+37
          %v451 = vand.u32 %v439, 2147483648
          %v452 = vor.u32 1.1754944e-38, %v451
          %v453 = vsel %vm450, %v452, %v448
          %454 = vst [vmem:[#allocation3] sm:$0x1] %v453
        $region64: #{tpu_custom_call.1} parent=39 // pred_fallthru
          _
        // Predicated region
        $region65: #{tpu_custom_call.1} parent=39 // pred_check
          %p455 = pneg %p421
        $region66: #{tpu_custom_call.1} parent=39 // pred_check_branch
          %457 = sbr.rel (%p455) target = $region68
        $region67: #{tpu_custom_call.1} parent=39 // pred_region
          %v458 = vld [vmem:[#allocation3] sm:$0x1]
          %v460 = vperm.slane %v458, 0
          %v462 = vmul.f32 %v348, %v460
          %463 = vst [vmem:[%s313] sm:$0xff] %v462
        $region68: #{tpu_custom_call.1} parent=39 // pred_fallthru
          _
        %s464 = sand.u32 %s160, 1
        %s465 = scalar_lea.sflag [#allocation6], %s464
        %s466 = sand.u32 %s160, 1
        %s467 = smul.addr %s466, 8
        %s468 = scalar_lea.vmem [#allocation10], %s467
        %s469 = sand.u32 %s188, 1
        %s470 = scalar_lea.sflag [#allocation12], %s469
        %s471 = sand.u32 %s188, 1
        %s472 = smul.addr %s471, 8
        %s473 = scalar_lea.vmem [#allocation11], %s472
        // Predicated region
        $region69: #{tpu_custom_call.1} parent=39 // pred_check
          %p474 = pneg %p170
        $region70: #{tpu_custom_call.1} parent=39 // pred_check_branch
          %476 = sbr.rel (%p474) target = $region72
        $region71: #{tpu_custom_call.1} parent=39 // pred_region
          %s477 = ssub.s32 1, %s30
          %s478 = smul.u32 %s31, %s477
          %480 = vsyncadd %s465, 0
          %s481 = smul.addr %s478, 8
          %s482 = scalar_lea.hbm %s5, %s481
          %s484 = sshll.u32 %s468, 4
          %s485 = int_to_ptr.vmem [resolvable:$true] %s484
          %s486 = sshll.u32 %s482, 4
          %s487 = int_to_ptr.hbm [resolvable:$true] %s486
          %489 = dma.vmem_to_hbm [thread:$0]  %s485, 128, %s487, %s465
        $region72: #{tpu_custom_call.1} parent=39 // pred_fallthru
          _
        // Predicated region
        $region73: #{tpu_custom_call.1} parent=39 // pred_check
          %p490 = pneg %p198
        $region74: #{tpu_custom_call.1} parent=39 // pred_check_branch
          %492 = sbr.rel (%p490) target = $region76
        $region75: #{tpu_custom_call.1} parent=39 // pred_region
          %s493 = smul.u32 %s31, %s30
          %495 = vsyncadd %s470, 0
          %s496 = smul.addr %s493, 8
          %s497 = scalar_lea.hbm %s6, %s496
          %s499 = sshll.u32 %s473, 4
          %s500 = int_to_ptr.vmem [resolvable:$true] %s499
          %s501 = sshll.u32 %s497, 4
          %s502 = int_to_ptr.hbm [resolvable:$true] %s501
          %504 = dma.vmem_to_hbm [thread:$0]  %s500, 128, %s502, %s470
        $region76: #{tpu_custom_call.1} parent=39 // pred_fallthru
          _
      $region40: #{tpu_custom_call.1} parent=5 // pred_fallthru
        _
      %p505 = scmp.le.s32.totalorder 2, %s21
      // Predicated region
      $region77: #{tpu_custom_call.1} parent=5 // pred_check
        %p506 = pneg %p505
      $region78: #{tpu_custom_call.1} parent=5 // pred_check_branch
        %508 = sbr.rel (%p506) target = $region80
      $region79: #{tpu_custom_call.1} parent=5 // pred_region
        %s509 = ssub.s32 %s21, 2
        // Predicated region
        $region81: #{tpu_custom_call.1} parent=79 // pred_check
          %p510 = pneg %p176
        $region82: #{tpu_custom_call.1} parent=79 // pred_check_branch
          %512 = sbr.rel (%p510) target = $region84
        $region83: #{tpu_custom_call.1} parent=79 // pred_region
          %s513 = sand.u32 %s161, 1
          %s514 = scalar_lea.sflag [#allocation6], %s513
          %s515 = sand.u32 %s161, 1
          %s516 = smul.addr %s515, 8
          %s517 = scalar_lea.vmem [#allocation10], %s516
          %519 = dma.done %s514, 128
        $region84: #{tpu_custom_call.1} parent=79 // pred_fallthru
          _
        // Predicated region
        $region85: #{tpu_custom_call.1} parent=79 // pred_check
          %p520 = pneg %p204
        $region86: #{tpu_custom_call.1} parent=79 // pred_check_branch
          %522 = sbr.rel (%p520) target = $region88
        $region87: #{tpu_custom_call.1} parent=79 // pred_region
          %s523 = sand.u32 %s189, 1
          %s524 = scalar_lea.sflag [#allocation12], %s523
          %s525 = sand.u32 %s189, 1
          %s526 = smul.addr %s525, 8
          %s527 = scalar_lea.vmem [#allocation11], %s526
          %529 = dma.done %s524, 128
        $region88: #{tpu_custom_call.1} parent=79 // pred_fallthru
          _
      $region80: #{tpu_custom_call.1} parent=5 // pred_fallthru
        _
    $region6: #{tpu_custom_call.1} parent=1 // loop_footer
      %s25 = sadd.s32 1, %s21
    $region7: #{tpu_custom_call.1} parent=1 // loop_footer_branch
      %20 = sbr.rel target = $region3
    $region8: #{tpu_custom_call.1} parent=1 // loop_exit
      _
    %530 = vsyncpa [#allocation5], 1
    %s531 = scalar_lea.sflag [#allocation5], 1
    %532 = vsyncpa %s531, 1
    %533 = vsyncpa [#allocation8], 1
    %534 = vsyncpa [#allocation6], 1
    %s535 = scalar_lea.sflag [#allocation6], 1
    %536 = vsyncpa %s535, 1
    %537 = vsyncpa [#allocation12], 1
    %s538 = scalar_lea.sflag [#allocation12], 1
    %539 = vsyncpa %s538, 1

</llo_original>
